<compile_context>
chip_gen: v7x
topology: tpu7x:2x2x1
jax: 0.10.0
libtpu: 0.0.40
codegen_flags: <defaults>
</compile_context>

<pallas_src>
import jax
import jax.numpy as jnp
from jax import lax
from jax.experimental import pallas as pl
from jax.experimental.pallas import tpu as pltpu

# ------------------------------------------------------------------ config ---
B = 64          # total batch (rows processed per call)
TB = 16         # batch tile per grid step (multiple of 8 sublanes)
D = 32          # input_dim
H = 64          # hidden_dim
K = 4           # top-k
IDX_BITS = max(1, (H - 1).bit_length())        # index bits packed into the top-k key
KEY_HI_MASK = -(1 << IDX_BITS)                 # clears the low IDX_BITS of the value bits
INT32_MIN = jnp.iinfo(jnp.int32).min


# ------------------------------------------------------------------ kernel ---
def sae_kernel(x_ref, pre_b_ref, w_enc_t_ref, b_enc_ref, dec_ref, inv_dec_ref,
               latent_ref, recon_ref):
    x = x_ref[...]                  # (TB, D) f32
    pre_b = pre_b_ref[...]          # (1, D)  f32
    b_enc = b_enc_ref[...]          # (1, H)  f32
    inv_dec = inv_dec_ref[...]      # (1, H)  f32  (precomputed 1/(||dec_row||+1e-8))

    # --- pre-bias + encoder (Linear + ReLU), bf16 operands on the MXU, f32 acc ---
    xc = x - pre_b
    pre = jnp.dot(xc.astype(jnp.bfloat16), w_enc_t_ref[...],      # (TB,D)@(D,H)
                  preferred_element_type=jnp.float32) + b_enc
    latent = jnp.maximum(pre, 0.0)                                 # (TB, H) f32, >= 0

    # --- top-k selection: one XLU max-reduce per step on a packed int32 key ---
    # latent >= 0 so its f32 bit pattern is order-preserving as int32.  The low
    # IDX_BITS of the mantissa are replaced by (H-1-col) so ties (e.g. exact zeros
    # after ReLU) break toward the smallest column index.  Selection differs from
    # exact top-k only when two values are within ~2^-(24-IDX_BITS) relative.
    col = lax.broadcasted_iota(jnp.int32, latent.shape, 1)
    vbits = pltpu.bitcast(latent, jnp.int32)
    key = (vbits & jnp.int32(KEY_HI_MASK)) | (H - 1 - col)         # all keys distinct
    keep = jnp.zeros(latent.shape, dtype=jnp.bool_)
    work = key
    for _ in range(K):                                             # K static -> unrolled
        m = jnp.max(work, axis=-1, keepdims=True)                  # single XLU reduce
        sel = work == m                                            # exactly one per row
        keep = jnp.logical_or(keep, sel)
        work = jnp.where(sel, INT32_MIN, work)
    latent = jnp.where(keep, latent, 0.0)
    latent_ref[...] = latent

    # --- decode: fold decoder row-norm into the latent (a (TB,H) multiply) ---
    scaled = (latent * inv_dec).astype(jnp.bfloat16)
    recon = jnp.dot(scaled, dec_ref[...],                          # (TB,H)@(H,D)
                    preferred_element_type=jnp.float32)
    recon = recon + pre_b                                          # tied pre-bias

    # --- per-sample reconstruction normalization ('recon' norm) ---
    ss = jnp.sum(recon * recon, axis=-1, keepdims=True)            # (TB, 1)
    inv = 1.0 / (jnp.sqrt(ss) + 1e-8)                              # narrow reciprocal
    recon_ref[...] = recon * inv                                   # broadcast multiply


# ---------------------------------------------------- parameter packing ------
def pack_params(pre_bias, w_enc, b_enc, decoder):
    """One-time parameter layout step (not per-call work):
    transpose W_enc to (D,H), cast weights to bf16, precompute decoder inv-norms."""
    dec_f32 = decoder.astype(jnp.float32)
    dec_norm = jnp.sqrt(jnp.sum(dec_f32 * dec_f32, axis=1)) + 1e-8   # (H,)
    return dict(
        pre_bias=pre_bias.reshape(1, D).astype(jnp.float32),
        w_enc_t=jnp.transpose(w_enc).astype(jnp.bfloat16),           # (D, H) bf16
        b_enc=b_enc.reshape(1, H).astype(jnp.float32),
        dec=decoder.astype(jnp.bfloat16),                            # (H, D) bf16
        inv_dec_norm=(1.0 / dec_norm).reshape(1, H).astype(jnp.float32),
    )


# ----------------------------------------------------------------- wrapper ---
def sae_forward(x, params):
    grid = (B // TB,)
    latent, recon = pl.pallas_call(
        sae_kernel,
        out_shape=(jax.ShapeDtypeStruct((B, H), jnp.float32),
                   jax.ShapeDtypeStruct((B, D), jnp.float32)),
        grid=grid,
        in_specs=[
            pl.BlockSpec((TB, D), lambda i: (i, 0)),   # x: tiled over batch
            pl.BlockSpec((1, D), lambda i: (0, 0)),    # pre_bias
            pl.BlockSpec((D, H), lambda i: (0, 0)),    # W_enc^T (bf16)
            pl.BlockSpec((1, H), lambda i: (0, 0)),    # b_enc
            pl.BlockSpec((H, D), lambda i: (0, 0)),    # decoder (bf16)
            pl.BlockSpec((1, H), lambda i: (0, 0)),    # 1/(||dec_row||+eps)
        ],
        out_specs=(
            pl.BlockSpec((TB, H), lambda i: (i, 0)),
            pl.BlockSpec((TB, D), lambda i: (i, 0)),
        ),
        # Batch axis is independent -> "parallel" (shards across the two TCs on v7x).
        compiler_params=pltpu.CompilerParams(
            dimension_semantics=("parallel",)),
    )(x, params["pre_bias"], params["w_enc_t"], params["b_enc"],
      params["dec"], params["inv_dec_norm"])
    return latent, recon


# --------------------------------------------------------- pure-JAX reference
def sae_reference(x, pre_bias, w_enc, b_enc, decoder):
    """Module semantics with the same bf16 matmul operands as the kernel.
    Top-k uses the same packed-key rule (smallest-index tie-break); it matches
    exact top-k whenever competing values are not within ~1e-5 relative."""
    xc = x - pre_bias[None, :]
    pre = jnp.dot(xc.astype(jnp.bfloat16), jnp.transpose(w_enc).astype(jnp.bfloat16),
                  preferred_element_type=jnp.float32) + b_enc[None, :]
    latent = jnp.maximum(pre, 0.0)

    col = jnp.arange(H, dtype=jnp.int32)[None, :]
    vbits = lax.bitcast_convert_type(latent, jnp.int32)
    key = (vbits & jnp.int32(KEY_HI_MASK)) | (H - 1 - col)
    keep = jnp.zeros(latent.shape, dtype=bool)
    work = key
    for _ in range(K):
        m = jnp.max(work, axis=-1, keepdims=True)
        sel = work == m
        keep = keep | sel
        work = jnp.where(sel, INT32_MIN, work)
    latent = jnp.where(keep, latent, 0.0)

    dec_norm = jnp.linalg.norm(decoder, axis=1) + 1e-8               # (H,)
    scaled = latent * (1.0 / dec_norm)[None, :]
    recon = jnp.dot(scaled.astype(jnp.bfloat16), decoder.astype(jnp.bfloat16),
                    preferred_element_type=jnp.float32)
    recon = recon + pre_bias[None, :]
    recon = recon / (jnp.linalg.norm(recon, axis=1, keepdims=True) + 1e-8)
    return latent, recon


# -------------------------------------------------------------------- main ---
if __name__ == "__main__":
    key = jax.random.PRNGKey(0)
    kx, kb, kw, kbe, kd = jax.random.split(key, 5)

    x = jax.random.normal(kx, (B, D), dtype=jnp.float32)
    pre_bias = 0.1 * jax.random.normal(kb, (D,), dtype=jnp.float32)
    w_enc = jax.random.normal(kw, (H, D), dtype=jnp.float32) / jnp.sqrt(D)
    b_enc = 0.1 * jax.random.normal(kbe, (H,), dtype=jnp.float32)
    decoder = jax.random.normal(kd, (H, D), dtype=jnp.float32)

    params = pack_params(pre_bias, w_enc, b_enc, decoder)
    latent, recon = sae_forward(x, params)
    jax.block_until_ready((latent, recon))

    lat_ref, rec_ref = sae_reference(x, pre_bias, w_enc, b_enc, decoder)

    # Latent: identical bf16 operands -> only accumulation-order differences.
    assert jnp.allclose(latent, lat_ref, atol=1e-4, rtol=1e-4)
    # Recon: tolerance covers bf16 rounding of the scaled-latent operand.
    assert jnp.allclose(recon, rec_ref, atol=1e-2, rtol=1e-2)
    # Structural checks: exactly K non-zeros per row, unit-norm reconstructions.
    assert bool(jnp.all(jnp.sum(latent != 0.0, axis=-1) == K))
    assert bool(jnp.allclose(jnp.linalg.norm(recon, axis=1), 1.0, atol=1e-3))

    print("KERNEL_OK")
</pallas_src>

<mosaic_0001>
module attributes {stable_mosaic.version = 11 : i64} {
  func.func @sae_kernel(%arg0: i32, %arg1: memref<16x32xf32, #tpu.memory_space<vmem>>, %arg2: memref<1x32xf32, #tpu.memory_space<vmem>>, %arg3: memref<32x64xbf16, #tpu.memory_space<vmem>>, %arg4: memref<1x64xf32, #tpu.memory_space<vmem>>, %arg5: memref<64x32xbf16, #tpu.memory_space<vmem>>, %arg6: memref<1x64xf32, #tpu.memory_space<vmem>>, %arg7: memref<16x64xf32, #tpu.memory_space<vmem>>, %arg8: memref<16x32xf32, #tpu.memory_space<vmem>>) attributes {dimension_semantics = [#tpu.dimension_semantics<parallel>], iteration_bounds = array<i64: 4>, scalar_prefetch = 0 : i64, scratch_operands = 0 : i64, tpu.core_type = #tpu.core_type<tc>, window_params = [{transform_indices = @transform_0, window_bounds = array<i64: 16, 32>}, {pipeline_mode = #tpu.pipeline_mode<synchronous>, transform_indices = @transform_1, window_bounds = array<i64: 1, 32>}, {pipeline_mode = #tpu.pipeline_mode<synchronous>, transform_indices = @transform_2, window_bounds = array<i64: 32, 64>}, {pipeline_mode = #tpu.pipeline_mode<synchronous>, transform_indices = @transform_3, window_bounds = array<i64: 1, 64>}, {pipeline_mode = #tpu.pipeline_mode<synchronous>, transform_indices = @transform_4, window_bounds = array<i64: 64, 32>}, {pipeline_mode = #tpu.pipeline_mode<synchronous>, transform_indices = @transform_5, window_bounds = array<i64: 1, 64>}, {transform_indices = @transform_6, window_bounds = array<i64: 16, 64>}, {transform_indices = @transform_7, window_bounds = array<i64: 16, 32>}]} {
    %c0 = arith.constant 0 : index
    %c0_0 = arith.constant 0 : index
    %0 = vector.load %arg1[%c0, %c0_0] : memref<16x32xf32, #tpu.memory_space<vmem>>, vector<16x32xf32>
    %c0_1 = arith.constant 0 : index
    %c0_2 = arith.constant 0 : index
    %1 = vector.load %arg2[%c0_1, %c0_2] : memref<1x32xf32, #tpu.memory_space<vmem>>, vector<1x32xf32>
    %c0_3 = arith.constant 0 : index
    %c0_4 = arith.constant 0 : index
    %2 = vector.load %arg4[%c0_3, %c0_4] : memref<1x64xf32, #tpu.memory_space<vmem>>, vector<1x64xf32>
    %c0_5 = arith.constant 0 : index
    %c0_6 = arith.constant 0 : index
    %3 = vector.load %arg6[%c0_5, %c0_6] : memref<1x64xf32, #tpu.memory_space<vmem>>, vector<1x64xf32>
    %4 = vector.broadcast %1 : vector<1x32xf32> to vector<16x32xf32>
    %5 = arith.subf %0, %4 : vector<16x32xf32>
    %6 = arith.truncf %5 : vector<16x32xf32> to vector<16x32xbf16>
    %c0_7 = arith.constant 0 : index
    %c0_8 = arith.constant 0 : index
    %7 = vector.load %arg3[%c0_7, %c0_8] : memref<32x64xbf16, #tpu.memory_space<vmem>>, vector<32x64xbf16>
    %cst = arith.constant dense<0.000000e+00> : vector<16x64xf32>
    %8 = tpu.matmul %6, %7, %cst {dimension_numbers = #tpu.dot_dimension_numbers<[1], [0], [0], [1], [0, 0, 1, 1], [], []>} : vector<16x32xbf16>, vector<32x64xbf16>, vector<16x64xf32> -> vector<16x64xf32>
    %9 = vector.broadcast %2 : vector<1x64xf32> to vector<16x64xf32>
    %10 = arith.addf %8, %9 : vector<16x64xf32>
    %cst_9 = arith.constant 0.000000e+00 : f32
    %11 = vector.broadcast %cst_9 : f32 to vector<16x64xf32>
    %12 = arith.maximumf %10, %11 : vector<16x64xf32>
    %13 = tpu.iota {dimensions = array<i32: 1>} : vector<16x64xi32>
    %14 = tpu.bitcast %12 : vector<16x64xf32> -> vector<16x64xi32>
    %c-64_i32 = arith.constant -64 : i32
    %15 = vector.broadcast %c-64_i32 : i32 to vector<16x64xi32>
    %16 = arith.andi %14, %15 : vector<16x64xi32>
    %c63_i32 = arith.constant 63 : i32
    %17 = vector.broadcast %c63_i32 : i32 to vector<16x64xi32>
    %18 = arith.subi %17, %13 : vector<16x64xi32>
    %19 = arith.ori %16, %18 : vector<16x64xi32>
    %false = arith.constant false
    %20 = vector.broadcast %false : i1 to vector<16x64xi1>
    %cst_10 = arith.constant dense<-2147483648> : vector<16xi32>
    %21 = vector.multi_reduction <maxsi>, %19, %cst_10 [1] : vector<16x64xi32> to vector<16xi32>
    %22 = vector.shape_cast %21 : vector<16xi32> to vector<16x1xi32>
    %23 = vector.broadcast %22 : vector<16x1xi32> to vector<16x64xi32>
    %24 = arith.cmpi eq, %19, %23 : vector<16x64xi32>
    %25 = arith.ori %20, %24 : vector<16x64xi1>
    %c-2147483648_i32 = arith.constant -2147483648 : i32
    %26 = vector.broadcast %c-2147483648_i32 : i32 to vector<16x64xi32>
    %27 = arith.select %24, %26, %19 : vector<16x64xi1>, vector<16x64xi32>
    %cst_11 = arith.constant dense<-2147483648> : vector<16xi32>
    %28 = vector.multi_reduction <maxsi>, %27, %cst_11 [1] : vector<16x64xi32> to vector<16xi32>
    %29 = vector.shape_cast %28 : vector<16xi32> to vector<16x1xi32>
    %30 = vector.broadcast %29 : vector<16x1xi32> to vector<16x64xi32>
    %31 = arith.cmpi eq, %27, %30 : vector<16x64xi32>
    %32 = arith.ori %25, %31 : vector<16x64xi1>
    %c-2147483648_i32_12 = arith.constant -2147483648 : i32
    %33 = vector.broadcast %c-2147483648_i32_12 : i32 to vector<16x64xi32>
    %34 = arith.select %31, %33, %27 : vector<16x64xi1>, vector<16x64xi32>
    %cst_13 = arith.constant dense<-2147483648> : vector<16xi32>
    %35 = vector.multi_reduction <maxsi>, %34, %cst_13 [1] : vector<16x64xi32> to vector<16xi32>
    %36 = vector.shape_cast %35 : vector<16xi32> to vector<16x1xi32>
    %37 = vector.broadcast %36 : vector<16x1xi32> to vector<16x64xi32>
    %38 = arith.cmpi eq, %34, %37 : vector<16x64xi32>
    %39 = arith.ori %32, %38 : vector<16x64xi1>
    %c-2147483648_i32_14 = arith.constant -2147483648 : i32
    %40 = vector.broadcast %c-2147483648_i32_14 : i32 to vector<16x64xi32>
    %41 = arith.select %38, %40, %34 : vector<16x64xi1>, vector<16x64xi32>
    %cst_15 = arith.constant dense<-2147483648> : vector<16xi32>
    %42 = vector.multi_reduction <maxsi>, %41, %cst_15 [1] : vector<16x64xi32> to vector<16xi32>
    %43 = vector.shape_cast %42 : vector<16xi32> to vector<16x1xi32>
    %44 = vector.broadcast %43 : vector<16x1xi32> to vector<16x64xi32>
    %45 = arith.cmpi eq, %41, %44 : vector<16x64xi32>
    %46 = arith.ori %39, %45 : vector<16x64xi1>
    %cst_16 = arith.constant 0.000000e+00 : f32
    %47 = vector.broadcast %cst_16 : f32 to vector<16x64xf32>
    %48 = arith.select %46, %12, %47 : vector<16x64xi1>, vector<16x64xf32>
    %c0_17 = arith.constant 0 : index
    %c0_18 = arith.constant 0 : index
    %49 = vector.load %arg7[%c0_17, %c0_18] : memref<16x64xf32, #tpu.memory_space<vmem>>, vector<16x64xf32>
    tpu.vector_store %arg7[%c0_17, %c0_18], %48 {strides = array<i32>} : memref<16x64xf32, #tpu.memory_space<vmem>>, vector<16x64xf32>,
    %50 = vector.broadcast %3 : vector<1x64xf32> to vector<16x64xf32>
    %51 = arith.mulf %48, %50 : vector<16x64xf32>
    %52 = arith.truncf %51 : vector<16x64xf32> to vector<16x64xbf16>
    %c0_19 = arith.constant 0 : index
    %c0_20 = arith.constant 0 : index
    %53 = vector.load %arg5[%c0_19, %c0_20] : memref<64x32xbf16, #tpu.memory_space<vmem>>, vector<64x32xbf16>
    %cst_21 = arith.constant dense<0.000000e+00> : vector<16x32xf32>
    %54 = tpu.matmul %52, %53, %cst_21 {dimension_numbers = #tpu.dot_dimension_numbers<[1], [0], [0], [1], [0, 0, 1, 1], [], []>} : vector<16x64xbf16>, vector<64x32xbf16>, vector<16x32xf32> -> vector<16x32xf32>
    %55 = vector.broadcast %1 : vector<1x32xf32> to vector<16x32xf32>
    %56 = arith.addf %54, %55 : vector<16x32xf32>
    %57 = arith.mulf %56, %56 : vector<16x32xf32>
    %cst_22 = arith.constant dense<0.000000e+00> : vector<16xf32>
    %58 = vector.multi_reduction <add>, %57, %cst_22 [1] : vector<16x32xf32> to vector<16xf32>
    %59 = vector.shape_cast %58 : vector<16xf32> to vector<16x1xf32>
    %60 = math.sqrt %59 : vector<16x1xf32>
    %cst_23 = arith.constant 9.99999993E-9 : f32
    %61 = vector.broadcast %cst_23 : f32 to vector<16x1xf32>
    %62 = arith.addf %60, %61 : vector<16x1xf32>
    %cst_24 = arith.constant 1.000000e+00 : f32
    %63 = vector.broadcast %cst_24 : f32 to vector<16x1xf32>
    %64 = arith.divf %63, %62 : vector<16x1xf32>
    %65 = vector.broadcast %64 : vector<16x1xf32> to vector<16x32xf32>
    %66 = arith.mulf %56, %65 : vector<16x32xf32>
    %c0_25 = arith.constant 0 : index
    %c0_26 = arith.constant 0 : index
    %67 = vector.load %arg8[%c0_25, %c0_26] : memref<16x32xf32, #tpu.memory_space<vmem>>, vector<16x32xf32>
    tpu.vector_store %arg8[%c0_25, %c0_26], %66 {strides = array<i32>} : memref<16x32xf32, #tpu.memory_space<vmem>>, vector<16x32xf32>,
    return
  }
  func.func @transform_0(%arg0: i32) -> (i32, i32) {
    %c0_i32 = arith.constant 0 : i32
    %c0_i32_0 = arith.constant 0 : i32
    return %arg0, %c0_i32 : i32, i32
  }
  func.func @transform_1(%arg0: i32) -> (i32, i32) {
    %c0_i32 = arith.constant 0 : i32
    %c0_i32_0 = arith.constant 0 : i32
    %c0_i32_1 = arith.constant 0 : i32
    return %c0_i32, %c0_i32_0 : i32, i32
  }
  func.func @transform_2(%arg0: i32) -> (i32, i32) {
    %c0_i32 = arith.constant 0 : i32
    %c0_i32_0 = arith.constant 0 : i32
    %c0_i32_1 = arith.constant 0 : i32
    return %c0_i32, %c0_i32_0 : i32, i32
  }
  func.func @transform_3(%arg0: i32) -> (i32, i32) {
    %c0_i32 = arith.constant 0 : i32
    %c0_i32_0 = arith.constant 0 : i32
    %c0_i32_1 = arith.constant 0 : i32
    return %c0_i32, %c0_i32_0 : i32, i32
  }
  func.func @transform_4(%arg0: i32) -> (i32, i32) {
    %c0_i32 = arith.constant 0 : i32
    %c0_i32_0 = arith.constant 0 : i32
    %c0_i32_1 = arith.constant 0 : i32
    return %c0_i32, %c0_i32_0 : i32, i32
  }
  func.func @transform_5(%arg0: i32) -> (i32, i32) {
    %c0_i32 = arith.constant 0 : i32
    %c0_i32_0 = arith.constant 0 : i32
    %c0_i32_1 = arith.constant 0 : i32
    return %c0_i32, %c0_i32_0 : i32, i32
  }
  func.func @transform_6(%arg0: i32) -> (i32, i32) {
    %c0_i32 = arith.constant 0 : i32
    %c0_i32_0 = arith.constant 0 : i32
    return %arg0, %c0_i32 : i32, i32
  }
  func.func @transform_7(%arg0: i32) -> (i32, i32) {
    %c0_i32 = arith.constant 0 : i32
    %c0_i32_0 = arith.constant 0 : i32
    return %arg0, %c0_i32 : i32, i32
  }
}

</mosaic_0001>

<llo_original>
// kernel: tpu_custom_call.1
$region0: #{tpu_custom_call.1}
  #allocation0 [shape = 'u32[]', space=smem, size = 0x4, offset = 0x4, fixed_abs, tag = 'smem constant byte address 0x4 - core index']
  #allocation1 [shape = 'u32[144,128]{1,0:T(1,128)}', space=vmem, size = 0x12000, scoped, tag = 'internal scratch']
  %s0 = inlined_call_operand.vmem [shape: f32[64,32], index: 0, kind: input, shape index: {}]
  %s1 = inlined_call_operand.vmem [shape: f32[1,32], index: 1, kind: input, shape index: {}]
  %s2 = inlined_call_operand.vmem [shape: bf16[32,64], index: 2, kind: input, shape index: {}]
  %s3 = inlined_call_operand.vmem [shape: f32[1,64], index: 3, kind: input, shape index: {}]
  %s4 = inlined_call_operand.vmem [shape: bf16[64,32], index: 4, kind: input, shape index: {}]
  %s5 = inlined_call_operand.vmem [shape: f32[1,64], index: 5, kind: input, shape index: {}]
  %s6 = inlined_call_operand.hbm [shape: f32[64,64], index: 6, kind: output, shape index: {0}]
  %s7 = inlined_call_operand.vmem [shape: f32[64,32], index: 7, kind: output, shape index: {1}]
  %8 = xla_tuple %s6, %s7
  %s9 = sld [smem:[#allocation0]]
  $region65: #{tpu_custom_call.1} parent=0
    _
  %s11 = ssub.s32 1, %s9
  %s12 = scalar_select 0, %s11, %s9
  $region1: #{tpu_custom_call.1} parent=0
    #allocation2 [shape = 'u8[16384]{0}', space=vmem, size = 0x4000, scoped, tag = 'output window, operand 0']
    #allocation3 [shape = 's32[2]{0}', space=sflag, size = 0x8, scoped, tag = 'scoped memory for tpu_custom_call.1']
    %13 = vsyncpa [#allocation3], 0
    %s14 = scalar_lea.sflag [#allocation3], 1
    %15 = vsyncpa %s14, 0
    loop: start=0, step=1, limit=6
    $region2: #{tpu_custom_call.1} parent=1 // loop_pre_header
      _
    $region3: #{tpu_custom_call.1} parent=1 // loop_header
      %s17 = sphi 0, %s21
      %p18 = scmp.ge.s32.totalorder %s17, 6
      %s27 = sphi 0, %s29
      %s30 = sphi 0, %s27
      %s31 = sphi 0, %s30
      %s47 = sphi 0, %s31
      %s51 = sphi 0, %s51
      %s53 = sphi 0, %s51
      %s54 = sphi 0, %s53
      %s68 = sphi 0, %s54
      %s72 = sphi 0, %s72
      %s74 = sphi 0, %s72
      %s75 = sphi 0, %s74
      %s89 = sphi 0, %s75
      %s93 = sphi 0, %s93
      %s95 = sphi 0, %s93
      %s96 = sphi 0, %s95
      %s110 = sphi 0, %s96
      %s114 = sphi 0, %s114
      %s116 = sphi 0, %s114
      %s117 = sphi 0, %s116
      %s131 = sphi 0, %s117
      %s135 = sphi 0, %s135
      %s137 = sphi 0, %s135
      %s138 = sphi 0, %s137
      %s152 = sphi 0, %s138
      %s158 = sphi 0, %s160
      %s161 = sphi 0, %s158
      %s162 = sphi 0, %s161
      %s178 = sphi 0, %s162
      %s184 = sphi 0, %s186
      %s187 = sphi 0, %s184
      %s188 = sphi 0, %s187
      %s204 = sphi 0, %s188
    $region4: #{tpu_custom_call.1} parent=1 // loop_header_branch
      %20 = sbr.rel (%p18) target = $region8
    $region5: #{tpu_custom_call.1} parent=1 // loop_body
      %s22 = ssub.s32 %s17, 1
      %s23 = ssub.s32 %s17, 2
      %s24 = sadd.s32 %s17, 1
      %s25 = ssub.s32 %s17, %s24
      %p26 = scmp.eq.s32.totalorder %s25, 0
      %s28 = sadd.s32 %s27, 1
      %s29 = scalar_select %p26, %s27, %s28
      %p32 = pneg %p26
      %p33 = scmp.eq.s32.totalorder %s17, 3
      %p34 = por %p32, %p33
      %p35 = scmp.ne.s32.totalorder %s27, %s30
      %p36 = scmp.eq.s32.totalorder %s17, 0
      %p37 = por %p35, %p36
      %p38 = scmp.ne.s32.totalorder %s27, %s30
      %p39 = scmp.eq.s32.totalorder %s22, 3
      %p40 = por %p38, %p39
      %p41 = scmp.ne.s32.totalorder %s30, %s31
      %p42 = scmp.eq.s32.totalorder %s22, 0
      %p43 = por %p41, %p42
      %p44 = scmp.ne.s32.totalorder %s30, %s31
      %p45 = scmp.eq.s32.totalorder %s23, 3
      %p46 = por %p44, %p45
      %p48 = scmp.ne.s32.totalorder %s31, %s47
      %p49 = scmp.eq.s32.totalorder %s23, 0
      %p50 = por %p48, %p49
      %s52 = sadd.s32 %s51, 1
      %p55 = scmp.eq.s32.totalorder %s17, 3
      %p56 = scmp.ne.s32.totalorder %s51, %s53
      %p57 = scmp.eq.s32.totalorder %s17, 0
      %p58 = por %p56, %p57
      %p59 = scmp.ne.s32.totalorder %s51, %s53
      %p60 = scmp.eq.s32.totalorder %s22, 3
      %p61 = por %p59, %p60
      %p62 = scmp.ne.s32.totalorder %s53, %s54
      %p63 = scmp.eq.s32.totalorder %s22, 0
      %p64 = por %p62, %p63
      %p65 = scmp.ne.s32.totalorder %s53, %s54
      %p66 = scmp.eq.s32.totalorder %s23, 3
      %p67 = por %p65, %p66
      %p69 = scmp.ne.s32.totalorder %s54, %s68
      %p70 = scmp.eq.s32.totalorder %s23, 0
      %p71 = por %p69, %p70
      %s73 = sadd.s32 %s72, 1
      %p76 = scmp.eq.s32.totalorder %s17, 3
      %p77 = scmp.ne.s32.totalorder %s72, %s74
      %p78 = scmp.eq.s32.totalorder %s17, 0
      %p79 = por %p77, %p78
      %p80 = scmp.ne.s32.totalorder %s72, %s74
      %p81 = scmp.eq.s32.totalorder %s22, 3
      %p82 = por %p80, %p81
      %p83 = scmp.ne.s32.totalorder %s74, %s75
      %p84 = scmp.eq.s32.totalorder %s22, 0
      %p85 = por %p83, %p84
      %p86 = scmp.ne.s32.totalorder %s74, %s75
      %p87 = scmp.eq.s32.totalorder %s23, 3
      %p88 = por %p86, %p87
      %p90 = scmp.ne.s32.totalorder %s75, %s89
      %p91 = scmp.eq.s32.totalorder %s23, 0
      %p92 = por %p90, %p91
      %s94 = sadd.s32 %s93, 1
      %p97 = scmp.eq.s32.totalorder %s17, 3
      %p98 = scmp.ne.s32.totalorder %s93, %s95
      %p99 = scmp.eq.s32.totalorder %s17, 0
      %p100 = por %p98, %p99
      %p101 = scmp.ne.s32.totalorder %s93, %s95
      %p102 = scmp.eq.s32.totalorder %s22, 3
      %p103 = por %p101, %p102
      %p104 = scmp.ne.s32.totalorder %s95, %s96
      %p105 = scmp.eq.s32.totalorder %s22, 0
      %p106 = por %p104, %p105
      %p107 = scmp.ne.s32.totalorder %s95, %s96
      %p108 = scmp.eq.s32.totalorder %s23, 3
      %p109 = por %p107, %p108
      %p111 = scmp.ne.s32.totalorder %s96, %s110
      %p112 = scmp.eq.s32.totalorder %s23, 0
      %p113 = por %p111, %p112
      %s115 = sadd.s32 %s114, 1
      %p118 = scmp.eq.s32.totalorder %s17, 3
      %p119 = scmp.ne.s32.totalorder %s114, %s116
      %p120 = scmp.eq.s32.totalorder %s17, 0
      %p121 = por %p119, %p120
      %p122 = scmp.ne.s32.totalorder %s114, %s116
      %p123 = scmp.eq.s32.totalorder %s22, 3
      %p124 = por %p122, %p123
      %p125 = scmp.ne.s32.totalorder %s116, %s117
      %p126 = scmp.eq.s32.totalorder %s22, 0
      %p127 = por %p125, %p126
      %p128 = scmp.ne.s32.totalorder %s116, %s117
      %p129 = scmp.eq.s32.totalorder %s23, 3
      %p130 = por %p128, %p129
      %p132 = scmp.ne.s32.totalorder %s117, %s131
      %p133 = scmp.eq.s32.totalorder %s23, 0
      %p134 = por %p132, %p133
      %s136 = sadd.s32 %s135, 1
      %p139 = scmp.eq.s32.totalorder %s17, 3
      %p140 = scmp.ne.s32.totalorder %s135, %s137
      %p141 = scmp.eq.s32.totalorder %s17, 0
      %p142 = por %p140, %p141
      %p143 = scmp.ne.s32.totalorder %s135, %s137
      %p144 = scmp.eq.s32.totalorder %s22, 3
      %p145 = por %p143, %p144
      %p146 = scmp.ne.s32.totalorder %s137, %s138
      %p147 = scmp.eq.s32.totalorder %s22, 0
      %p148 = por %p146, %p147
      %p149 = scmp.ne.s32.totalorder %s137, %s138
      %p150 = scmp.eq.s32.totalorder %s23, 3
      %p151 = por %p149, %p150
      %p153 = scmp.ne.s32.totalorder %s138, %s152
      %p154 = scmp.eq.s32.totalorder %s23, 0
      %p155 = por %p153, %p154
      %s156 = ssub.s32 %s17, %s24
      %p157 = scmp.eq.s32.totalorder %s156, 0
      %s159 = sadd.s32 %s158, 1
      %s160 = scalar_select %p157, %s158, %s159
      %p163 = pneg %p157
      %p164 = scmp.eq.s32.totalorder %s17, 3
      %p165 = por %p163, %p164
      %p166 = scmp.ne.s32.totalorder %s158, %s161
      %p167 = scmp.eq.s32.totalorder %s17, 0
      %p168 = por %p166, %p167
      %p169 = scmp.ne.s32.totalorder %s158, %s161
      %p170 = scmp.eq.s32.totalorder %s22, 3
      %p171 = por %p169, %p170
      %p172 = scmp.ne.s32.totalorder %s161, %s162
      %p173 = scmp.eq.s32.totalorder %s22, 0
      %p174 = por %p172, %p173
      %p175 = scmp.ne.s32.totalorder %s161, %s162
      %p176 = scmp.eq.s32.totalorder %s23, 3
      %p177 = por %p175, %p176
      %p179 = scmp.ne.s32.totalorder %s162, %s178
      %p180 = scmp.eq.s32.totalorder %s23, 0
      %p181 = por %p179, %p180
      %s182 = ssub.s32 %s17, %s24
      %p183 = scmp.eq.s32.totalorder %s182, 0
      %s185 = sadd.s32 %s184, 1
      %s186 = scalar_select %p183, %s184, %s185
      %p189 = pneg %p183
      %p190 = scmp.eq.s32.totalorder %s17, 3
      %p191 = por %p189, %p190
      %p192 = scmp.ne.s32.totalorder %s184, %s187
      %p193 = scmp.eq.s32.totalorder %s17, 0
      %p194 = por %p192, %p193
      %p195 = scmp.ne.s32.totalorder %s184, %s187
      %p196 = scmp.eq.s32.totalorder %s22, 3
      %p197 = por %p195, %p196
      %p198 = scmp.ne.s32.totalorder %s187, %s188
      %p199 = scmp.eq.s32.totalorder %s22, 0
      %p200 = por %p198, %p199
      %p201 = scmp.ne.s32.totalorder %s187, %s188
      %p202 = scmp.eq.s32.totalorder %s23, 3
      %p203 = por %p201, %p202
      %p205 = scmp.ne.s32.totalorder %s188, %s204
      %p206 = scmp.eq.s32.totalorder %s23, 0
      %p207 = por %p205, %p206
      %p208 = scmp.le.s32.totalorder 1, %s17
      %p209 = scmp.lt.s32.totalorder %s17, 5
      %p210 = pnand %p208, %p209
      %p211 = pneg %p210
      // Predicated region
      $region9: #{tpu_custom_call.1} parent=5 // pred_check
        _
      $region10: #{tpu_custom_call.1} parent=5 // pred_check_branch
        %213 = sbr.rel (%p210) target = $region12
      $region11: #{tpu_custom_call.1} parent=5 // pred_region
        %s214 = ssub.s32 %s17, 1
        // Predicated region
        $region13: #{tpu_custom_call.1} parent=11 // pred_check
          %p215 = pneg %p64
        $region14: #{tpu_custom_call.1} parent=11 // pred_check_branch
          %217 = sbr.rel (%p215) target = $region16
        $region15: #{tpu_custom_call.1} parent=11 // pred_region
          _
        $region16: #{tpu_custom_call.1} parent=11 // pred_fallthru
          _
        // Predicated region
        $region17: #{tpu_custom_call.1} parent=11 // pred_check
          %p218 = pneg %p85
        $region18: #{tpu_custom_call.1} parent=11 // pred_check_branch
          %220 = sbr.rel (%p218) target = $region20
        $region19: #{tpu_custom_call.1} parent=11 // pred_region
          _
        $region20: #{tpu_custom_call.1} parent=11 // pred_fallthru
          _
        // Predicated region
        $region21: #{tpu_custom_call.1} parent=11 // pred_check
          %p221 = pneg %p106
        $region22: #{tpu_custom_call.1} parent=11 // pred_check_branch
          %223 = sbr.rel (%p221) target = $region24
        $region23: #{tpu_custom_call.1} parent=11 // pred_region
          _
        $region24: #{tpu_custom_call.1} parent=11 // pred_fallthru
          _
        // Predicated region
        $region25: #{tpu_custom_call.1} parent=11 // pred_check
          %p224 = pneg %p127
        $region26: #{tpu_custom_call.1} parent=11 // pred_check_branch
          %226 = sbr.rel (%p224) target = $region28
        $region27: #{tpu_custom_call.1} parent=11 // pred_region
          _
        $region28: #{tpu_custom_call.1} parent=11 // pred_fallthru
          _
        // Predicated region
        $region29: #{tpu_custom_call.1} parent=11 // pred_check
          %p227 = pneg %p148
        $region30: #{tpu_custom_call.1} parent=11 // pred_check_branch
          %229 = sbr.rel (%p227) target = $region32
        $region31: #{tpu_custom_call.1} parent=11 // pred_region
          _
        $region32: #{tpu_custom_call.1} parent=11 // pred_fallthru
          _
      $region12: #{tpu_custom_call.1} parent=5 // pred_fallthru
        _
      %p230 = scmp.lt.s32.totalorder %s17, 4
      // Predicated region
      $region33: #{tpu_custom_call.1} parent=5 // pred_check
        %p231 = pneg %p230
      $region34: #{tpu_custom_call.1} parent=5 // pred_check_branch
        %233 = sbr.rel (%p231) target = $region36
      $region35: #{tpu_custom_call.1} parent=5 // pred_region
        // Predicated region
        $region37: #{tpu_custom_call.1} parent=35 // pred_check
          %p234 = pneg %p37
        $region38: #{tpu_custom_call.1} parent=35 // pred_check_branch
          %236 = sbr.rel (%p234) target = $region40
        $region39: #{tpu_custom_call.1} parent=35 // pred_region
          %s237 = smul.u32 2, %s17
          %p238 = scmp.lt.s32.totalorder %s237, 7
          %s239 = scalar_select %p238, %s237, 7
          %s240 = smul.addr %s239, 8
          %s241 = scalar_lea.vmem %s0, %s240
          %s242 = smul.u32 2, %s17
        $region40: #{tpu_custom_call.1} parent=35 // pred_fallthru
          _
      $region36: #{tpu_custom_call.1} parent=5 // pred_fallthru
        _
      %p243 = scmp.le.s32.totalorder 1, %s17
      %p244 = scmp.lt.s32.totalorder %s17, 5
      %p245 = pnand %p243, %p244
      %p246 = pneg %p245
      // Predicated region
      $region41: #{tpu_custom_call.1} parent=5 // pred_check
        _
      $region42: #{tpu_custom_call.1} parent=5 // pred_check_branch
        %248 = sbr.rel (%p245) target = $region44
      $region43: #{tpu_custom_call.1} parent=5 // pred_region
        %s249 = ssub.s32 %s17, 1
        %s250 = smul.u32 2, %s22
        %p251 = scmp.lt.s32.totalorder %s250, 7
        %s252 = scalar_select %p251, %s250, 7
        %s253 = smul.addr %s252, 8
        %s254 = scalar_lea.vmem %s0, %s253
        %p255 = pneg %p43
        %p256 = pneg %p40
        %p257 = pneg %p64
        %p258 = pneg %p61
        %p259 = pneg %p85
        %p260 = pneg %p82
        %p261 = pneg %p106
        %p262 = pneg %p103
        %p263 = pneg %p127
        %p264 = pneg %p124
        %p265 = pneg %p148
        %p266 = pneg %p145
        %p267 = pneg %p174
        %p268 = pneg %p171
        %s269 = sand.u32 %s161, 1
        %s270 = scalar_lea.sflag [#allocation3], %s269
        %s271 = sand.u32 %s161, 1
        %s272 = smul.addr %s271, 16
        %s273 = scalar_lea.vmem [#allocation2], %s272
        %p274 = pneg %p200
        %p275 = pneg %p197
        %s276 = smul.u32 2, %s22
        %p277 = scmp.lt.s32.totalorder %s276, 7
        %s278 = scalar_select %p277, %s276, 7
        %s279 = smul.addr %s278, 8
        %s280 = scalar_lea.vmem %s7, %s279
        %s281 = smul.u32 2, %s22
        %p282 = scmp.lt.s32.totalorder %s281, 7
        %s283 = scalar_select %p282, %s281, 7
        %s284 = smul.addr %s283, 8
        %s285 = scalar_lea.vmem %s0, %s284
        %s286 = smul.u32 2, %s22
        %s287 = smul.u32 2, %s22
        %s288 = smul.u32 2, %s22
        %p289 = scmp.lt.s32.totalorder %s288, 7
        %s290 = scalar_select %p289, %s288, 7
        %s291 = smul.addr %s290, 8
        %s292 = scalar_lea.vmem %s7, %s291
        %s293 = smul.u32 2, %s22
        %v295 = vld [vmem:[%s285] sm:$0xff]
        %v296 = vld [vmem:[%s285 + $0x8] sm:$0xff]
        %v297 = vld [vmem:[%s1] sm:$0x1]
        %v298 = vld [vmem:[%s3] sm:$0x1]
        %v299 = vld [vmem:[%s5] sm:$0x1]
        %v301 = vlaneseq
        %v302 = vshrl.u32 %v301, 7
        %v303 = vsub.s32 0, %v302
        %v304 = vrot.slane %v297, %v303
        %v306 = vsub.f32 %v295, %v304
        %v307 = vsub.f32 %v296, %v304
        %v308 = vpack.c.bf16 %v307, %v306
        %v309 = vld [vmem:[%s2] sm:$0xf]
        %v310 = vld [vmem:[%s2 + $0x4] sm:$0xf]
        %v311 = vld [vmem:[%s2 + $0x8] sm:$0xf]
        %v312 = vld [vmem:[%s2 + $0xc] sm:$0xf]
        %v314 = vlaneseq
        %v315 = vshrl.u32 %v314, 7
        %v316 = vsub.s32 0, %v315
        %v317 = vrot.slane %v298, %v316
        %v323 = vunpack.c.l.b16 %v309
        %v324 = vunpack.c.l.b16 %v310
        %v325 = vunpack.c.l.b16 %v311
        %v326 = vunpack.c.l.b16 %v312
        %v327 = vpack.c.b16 %v324, %v323
        %v328 = vpack.c.b16 %v326, %v325
        %vm331 = vcmask 261120
        %v333 = vsel %vm331, %v308, 0
        %335 = vmatprep.subr.bf16.mxu0 0
        %336 = vmatpush1.bf16.msra.mxu0 %v327
        %337 = vmatprep.subr.bf16.mxu0 0
        %338 = vmatpush1.bf16.msra.mxu0 %v328
        %339 = vmatprep.subr.bf16.mxu0 0
        %340 = vmatpush1.bf16.msra.mxu0 0
        %341 = vmatprep.subr.bf16.mxu0 0
        %342 = vmatpush1.bf16.msra.mxu0 0
        %343 = vmatprep.subr.bf16.mxu0 0
        %344 = vmatpush1.bf16.msra.mxu0 0
        %345 = vmatprep.subr.bf16.mxu0 0
        %346 = vmatpush1.bf16.msra.mxu0 0
        %347 = vmatprep.subr.bf16.mxu0 0
        %348 = vmatpush1.bf16.msra.mxu0 0
        %349 = vmatprep.subr.bf16.mxu0 0
        %350 = vmatpush1.bf16.msra.mxu0 0
        %351 = vmatprep.subr.bf16.mxu0 0
        %352 = vmatpush1.bf16.msra.mxu0 0
        %353 = vmatprep.subr.bf16.mxu0 0
        %354 = vmatpush1.bf16.msra.mxu0 0
        %355 = vmatprep.subr.bf16.mxu0 0
        %356 = vmatpush1.bf16.msra.mxu0 0
        %357 = vmatprep.subr.bf16.mxu0 0
        %358 = vmatpush1.bf16.msra.mxu0 0
        %359 = vmatprep.subr.bf16.mxu0 0
        %360 = vmatpush1.bf16.msra.mxu0 0
        %361 = vmatprep.subr.bf16.mxu0 0
        %362 = vmatpush1.bf16.msra.mxu0 0
        %363 = vmatprep.subr.bf16.mxu0 0
        %364 = vmatpush1.bf16.msra.mxu0 0
        %365 = vmatprep.subr.bf16.mxu0 0
        %366 = vmatpush1.bf16.msra.mxu0 0
        %367 = vmatprep.mubr.bf16.mxu0 0
        %368 = vmatmul.mubr.bf16.gmra.mrb[0].mxu0 %v333
        %v369 = vpop.f32.mrb[0].mxu0
        %v370 = vadd.f32 %v317, %v369
        %v371 = vpop.f32.mrb[0].mxu0
        %v372 = vpop.f32.mrb[0].mxu0
        %v373 = vadd.f32 %v317, %v372
        %v374 = vpop.f32.mrb[0].mxu0
        %375 = vdwg.mxu0
        %v376 = vmax.f32 %v370, 0.0
        %v377 = vmax.f32 %v373, 0.0
        %v378 = vlaneseq
        %v379 = vand.u32 %v378, 127
        %v382 = vand.u32 %v376, 4294967232
        %v383 = vand.u32 %v377, 4294967232
        %v384 = vsub.s32 63, %v379
        %v385 = vor.u32 %v382, %v384
        %v386 = vor.u32 %v383, %v384
        %vm387 = vcmask 523264
        %v388 = vsel %vm387, %v385, 2147483648
        %v389 = vand.u32 %v388, 65535
        %v390 = vshra.s32 %v388, 16
        %v391 = vcvt.s32.f32 %v389
        %v392 = vcvt.s32.f32 %v390
        %393 = vmax.xlane.f32.xlu0 %v392
        %v394 = vpop.xlane.xlu0 %393
        %vm395 = vcmp.eq.f32.partialorder %v392, %v394
        %v396 = vsel %vm395, %v391, -inf
        %397 = vmax.xlane.f32.xlu0 %v396
        %v398 = vpop.xlane.xlu0 %397
        %v399 = vcvt.f32.s32 %v398
        %v400 = vcvt.f32.s32 %v394
        %v401 = vshll.u32 %v400, 16
        %v402 = vadd.s32 %v401, %v399
        %v403 = vsel %vm387, %v386, 2147483648
        %v404 = vand.u32 %v403, 65535
        %v405 = vshra.s32 %v403, 16
        %v406 = vcvt.s32.f32 %v404
        %v407 = vcvt.s32.f32 %v405
        %408 = vmax.xlane.f32.xlu0 %v407
        %v409 = vpop.xlane.xlu0 %408
        %vm410 = vcmp.eq.f32.partialorder %v407, %v409
        %v411 = vsel %vm410, %v406, -inf
        %412 = vmax.xlane.f32.xlu0 %v411
        %v413 = vpop.xlane.xlu0 %412
        %v414 = vcvt.f32.s32 %v413
        %v415 = vcvt.f32.s32 %v409
        %v416 = vshll.u32 %v415, 16
        %v417 = vadd.s32 %v416, %v414
        %vm418 = vcmp.eq.s32.totalorder %v385, %v402
        %vm419 = vcmp.eq.s32.totalorder %v386, %v417
        %v420 = vsel %vm418, 2147483648, %v385
        %v421 = vsel %vm419, 2147483648, %v386
        %v422 = vsel %vm387, %v420, 2147483648
        %v423 = vand.u32 %v422, 65535
        %v424 = vshra.s32 %v422, 16
        %v425 = vcvt.s32.f32 %v423
        %v426 = vcvt.s32.f32 %v424
        %427 = vmax.xlane.f32.xlu0 %v426
        %v428 = vpop.xlane.xlu0 %427
        %vm429 = vcmp.eq.f32.partialorder %v426, %v428
        %v430 = vsel %vm429, %v425, -inf
        %431 = vmax.xlane.f32.xlu0 %v430
        %v432 = vpop.xlane.xlu0 %431
        %v433 = vcvt.f32.s32 %v432
        %v434 = vcvt.f32.s32 %v428
        %v435 = vshll.u32 %v434, 16
        %v436 = vadd.s32 %v435, %v433
        %v437 = vsel %vm387, %v421, 2147483648
        %v438 = vand.u32 %v437, 65535
        %v439 = vshra.s32 %v437, 16
        %v440 = vcvt.s32.f32 %v438
        %v441 = vcvt.s32.f32 %v439
        %442 = vmax.xlane.f32.xlu0 %v441
        %v443 = vpop.xlane.xlu0 %442
        %vm444 = vcmp.eq.f32.partialorder %v441, %v443
        %v445 = vsel %vm444, %v440, -inf
        %446 = vmax.xlane.f32.xlu0 %v445
        %v447 = vpop.xlane.xlu0 %446
        %v448 = vcvt.f32.s32 %v447
        %v449 = vcvt.f32.s32 %v443
        %v450 = vshll.u32 %v449, 16
        %v451 = vadd.s32 %v450, %v448
        %vm452 = vcmp.eq.s32.totalorder %v420, %v436
        %vm453 = vcmp.eq.s32.totalorder %v421, %v451
        %vm454 = vmor %vm418, %vm452
        %vm455 = vmor %vm419, %vm453
        %v456 = vsel %vm452, 2147483648, %v420
        %v457 = vsel %vm453, 2147483648, %v421
        %v458 = vsel %vm387, %v456, 2147483648
        %v459 = vand.u32 %v458, 65535
        %v460 = vshra.s32 %v458, 16
        %v461 = vcvt.s32.f32 %v459
        %v462 = vcvt.s32.f32 %v460
        %463 = vmax.xlane.f32.xlu0 %v462
        %v464 = vpop.xlane.xlu0 %463
        %vm465 = vcmp.eq.f32.partialorder %v462, %v464
        %v466 = vsel %vm465, %v461, -inf
        %467 = vmax.xlane.f32.xlu0 %v466
        %v468 = vpop.xlane.xlu0 %467
        %v469 = vcvt.f32.s32 %v468
        %v470 = vcvt.f32.s32 %v464
        %v471 = vshll.u32 %v470, 16
        %v472 = vadd.s32 %v471, %v469
        %v473 = vsel %vm387, %v457, 2147483648
        %v474 = vand.u32 %v473, 65535
        %v475 = vshra.s32 %v473, 16
        %v476 = vcvt.s32.f32 %v474
        %v477 = vcvt.s32.f32 %v475
        %478 = vmax.xlane.f32.xlu0 %v477
        %v479 = vpop.xlane.xlu0 %478
        %vm480 = vcmp.eq.f32.partialorder %v477, %v479
        %v481 = vsel %vm480, %v476, -inf
        %482 = vmax.xlane.f32.xlu0 %v481
        %v483 = vpop.xlane.xlu0 %482
        %v484 = vcvt.f32.s32 %v483
        %v485 = vcvt.f32.s32 %v479
        %v486 = vshll.u32 %v485, 16
        %v487 = vadd.s32 %v486, %v484
        %vm488 = vcmp.eq.s32.totalorder %v456, %v472
        %vm489 = vcmp.eq.s32.totalorder %v457, %v487
        %vm490 = vmor %vm454, %vm488
        %vm491 = vmor %vm455, %vm489
        %v492 = vsel %vm488, 2147483648, %v456
        %v493 = vsel %vm489, 2147483648, %v457
        %v494 = vsel %vm387, %v492, 2147483648
        %v495 = vand.u32 %v494, 65535
        %v496 = vshra.s32 %v494, 16
        %v497 = vcvt.s32.f32 %v495
        %v498 = vcvt.s32.f32 %v496
        %499 = vmax.xlane.f32.xlu0 %v498
        %v500 = vpop.xlane.xlu0 %499
        %vm501 = vcmp.eq.f32.partialorder %v498, %v500
        %v502 = vsel %vm501, %v497, -inf
        %503 = vmax.xlane.f32.xlu0 %v502
        %v504 = vpop.xlane.xlu0 %503
        %v505 = vcvt.f32.s32 %v504
        %v506 = vcvt.f32.s32 %v500
        %v507 = vshll.u32 %v506, 16
        %v508 = vadd.s32 %v507, %v505
        %v509 = vsel %vm387, %v493, 2147483648
        %v510 = vand.u32 %v509, 65535
        %v511 = vshra.s32 %v509, 16
        %v512 = vcvt.s32.f32 %v510
        %v513 = vcvt.s32.f32 %v511
        %514 = vmax.xlane.f32.xlu0 %v513
        %v515 = vpop.xlane.xlu0 %514
        %vm516 = vcmp.eq.f32.partialorder %v513, %v515
        %v517 = vsel %vm516, %v512, -inf
        %518 = vmax.xlane.f32.xlu0 %v517
        %v519 = vpop.xlane.xlu0 %518
        %v520 = vcvt.f32.s32 %v519
        %v521 = vcvt.f32.s32 %v515
        %v522 = vshll.u32 %v521, 16
        %v523 = vadd.s32 %v522, %v520
        %vm524 = vcmp.eq.s32.totalorder %v492, %v508
        %vm525 = vcmp.eq.s32.totalorder %v493, %v523
        %vm526 = vmor %vm490, %vm524
        %vm527 = vmor %vm491, %vm525
        %v528 = vsel %vm526, %v376, 0.0
        %v529 = vsel %vm527, %v377, 0.0
        %530 = vst.msk [vmem:[%s273] sm:$0xff] %vm387, %v528
        %531 = vst.msk [vmem:[%s273 + $0x8] sm:$0xff] %vm387, %v529
        %v533 = vlaneseq
        %v534 = vshrl.u32 %v533, 7
        %v535 = vsub.s32 0, %v534
        %v536 = vrot.slane %v299, %v535
        %v538 = vmul.f32 %v528, %v536
        %v539 = vmul.f32 %v529, %v536
        %v540 = vpack.c.bf16 %v539, %v538
        %v541 = vld [vmem:[%s4] sm:$0xf]
        %v542 = vld [vmem:[%s4 + $0x4] sm:$0xf]
        %v543 = vld [vmem:[%s4 + $0x8] sm:$0xf]
        %v544 = vld [vmem:[%s4 + $0xc] sm:$0xf]
        %v545 = vld [vmem:[%s4 + $0x10] sm:$0xf]
        %v546 = vld [vmem:[%s4 + $0x14] sm:$0xf]
        %v547 = vld [vmem:[%s4 + $0x18] sm:$0xf]
        %v548 = vld [vmem:[%s4 + $0x1c] sm:$0xf]
        %v557 = vunpack.c.l.b16 %v541
        %v558 = vunpack.c.l.b16 %v542
        %v559 = vunpack.c.l.b16 %v543
        %v560 = vunpack.c.l.b16 %v544
        %v561 = vunpack.c.l.b16 %v545
        %v562 = vunpack.c.l.b16 %v546
        %v563 = vunpack.c.l.b16 %v547
        %v564 = vunpack.c.l.b16 %v548
        %v565 = vpack.c.b16 %v558, %v557
        %v566 = vpack.c.b16 %v560, %v559
        %v567 = vpack.c.b16 %v562, %v561
        %v568 = vpack.c.b16 %v564, %v563
        %v574 = vsel %vm387, %v540, 0
        %576 = vmatprep.subr.bf16.mxu0 0
        %577 = vmatpush1.bf16.msra.mxu0 %v565
        %578 = vmatprep.subr.bf16.mxu0 0
        %579 = vmatpush1.bf16.msra.mxu0 %v566
        %580 = vmatprep.subr.bf16.mxu0 0
        %581 = vmatpush1.bf16.msra.mxu0 %v567
        %582 = vmatprep.subr.bf16.mxu0 0
        %583 = vmatpush1.bf16.msra.mxu0 %v568
        %584 = vmatprep.subr.bf16.mxu0 0
        %585 = vmatpush1.bf16.msra.mxu0 0
        %586 = vmatprep.subr.bf16.mxu0 0
        %587 = vmatpush1.bf16.msra.mxu0 0
        %588 = vmatprep.subr.bf16.mxu0 0
        %589 = vmatpush1.bf16.msra.mxu0 0
        %590 = vmatprep.subr.bf16.mxu0 0
        %591 = vmatpush1.bf16.msra.mxu0 0
        %592 = vmatprep.subr.bf16.mxu0 0
        %593 = vmatpush1.bf16.msra.mxu0 0
        %594 = vmatprep.subr.bf16.mxu0 0
        %595 = vmatpush1.bf16.msra.mxu0 0
        %596 = vmatprep.subr.bf16.mxu0 0
        %597 = vmatpush1.bf16.msra.mxu0 0
        %598 = vmatprep.subr.bf16.mxu0 0
        %599 = vmatpush1.bf16.msra.mxu0 0
        %600 = vmatprep.subr.bf16.mxu0 0
        %601 = vmatpush1.bf16.msra.mxu0 0
        %602 = vmatprep.subr.bf16.mxu0 0
        %603 = vmatpush1.bf16.msra.mxu0 0
        %604 = vmatprep.subr.bf16.mxu0 0
        %605 = vmatpush1.bf16.msra.mxu0 0
        %606 = vmatprep.subr.bf16.mxu0 0
        %607 = vmatpush1.bf16.msra.mxu0 0
        %608 = vmatprep.mubr.bf16.mxu0 0
        %609 = vmatmul.mubr.bf16.gmra.mrb[0].mxu0 %v574
        %v610 = vpop.f32.mrb[0].mxu0
        %v611 = vadd.f32 %v304, %v610
        %v612 = vpop.f32.mrb[0].mxu0
        %v613 = vpop.f32.mrb[0].mxu0
        %v614 = vadd.f32 %v304, %v613
        %v615 = vpop.f32.mrb[0].mxu0
        %616 = vdwg.mxu0
        %v617 = vmul.f32 %v611, %v611
        %v618 = vmul.f32 %v614, %v614
        %v619 = vsel %vm331, %v617, 0.0
        %620 = vadd.xlane.f32.xlu0 %v619
        %v621 = vpop.xlane.xlu0 %620
        %v622 = vsel %vm331, %v618, 0.0
        %623 = vadd.xlane.f32.xlu0 %v622
        %v624 = vpop.xlane.xlu0 %623
        %v625 = vrsqrt.pop %v621
        %v626 = vmul.f32 %v621, %v625
        %vm627 = vcmp.eq.f32.partialorder %v621, inf
        %v628 = vsel %vm627, %v621, %v626
        %vm629 = vcmp.eq.f32.partialorder %v621, 0.0
        %v630 = vand.u32 %v621, 2147483648
        %v631 = vsel %vm629, %v630, %v628
        %v632 = vrsqrt.pop %v624
        %v633 = vmul.f32 %v624, %v632
        %vm634 = vcmp.eq.f32.partialorder %v624, inf
        %v635 = vsel %vm634, %v624, %v633
        %vm636 = vcmp.eq.f32.partialorder %v624, 0.0
        %v637 = vand.u32 %v624, 2147483648
        %v638 = vsel %vm636, %v637, %v635
        %v639 = vadd.f32 %v631, 1e-08
        %v640 = vadd.f32 %v638, 1e-08
        %v641 = vrcp.pop %v639
        %v642 = vmul.f32 1.0, %v641
        %v643 = vrcp.pop %v640
        %v644 = vmul.f32 1.0, %v643
        %v645 = vmul.f32 %v611, %v642
        %v646 = vmul.f32 %v614, %v644
        %647 = vst.msk [vmem:[%s292] sm:$0xff] %vm331, %v645
        %648 = vst.msk [vmem:[%s292 + $0x8] sm:$0xff] %vm331, %v646
        %s649 = sand.u32 %s161, 1
        %s650 = scalar_lea.sflag [#allocation3], %s649
        %s651 = sand.u32 %s161, 1
        %s652 = smul.addr %s651, 16
        %s653 = scalar_lea.vmem [#allocation2], %s652
        %s654 = smul.u32 2, %s22
        %p655 = scmp.lt.s32.totalorder %s654, 7
        %s656 = scalar_select %p655, %s654, 7
        %s657 = smul.addr %s656, 8
        %s658 = scalar_lea.vmem %s7, %s657
        // Predicated region
        $region45: #{tpu_custom_call.1} parent=43 // pred_check
          %p659 = pneg %p171
        $region46: #{tpu_custom_call.1} parent=43 // pred_check_branch
          %661 = sbr.rel (%p659) target = $region48
        $region47: #{tpu_custom_call.1} parent=43 // pred_region
          %s662 = smul.u32 2, %s22
          %s664 = ssub.s32 256, 256
          %665 = vsyncadd %s650, %s664
          %s666 = smul.addr %s662, 128
          %s667 = scalar_lea.hbm %s6, %s666
          %s668 = sshll.u32 %s653, 4
          %s669 = int_to_ptr.vmem [resolvable:$true] %s668
          %674 = dma.vmem_to_hbm [thread:$0]  %s669, 256, %s667, %s650, 128, 128, 8
        $region48: #{tpu_custom_call.1} parent=43 // pred_fallthru
          _
        // Predicated region
        $region49: #{tpu_custom_call.1} parent=43 // pred_check
          %p675 = pneg %p197
        $region50: #{tpu_custom_call.1} parent=43 // pred_check_branch
          %677 = sbr.rel (%p675) target = $region52
        $region51: #{tpu_custom_call.1} parent=43 // pred_region
          %s678 = smul.u32 2, %s22
        $region52: #{tpu_custom_call.1} parent=43 // pred_fallthru
          _
      $region44: #{tpu_custom_call.1} parent=5 // pred_fallthru
        _
      %p679 = scmp.le.s32.totalorder 2, %s17
      // Predicated region
      $region53: #{tpu_custom_call.1} parent=5 // pred_check
        %p680 = pneg %p679
      $region54: #{tpu_custom_call.1} parent=5 // pred_check_branch
        %682 = sbr.rel (%p680) target = $region56
      $region55: #{tpu_custom_call.1} parent=5 // pred_region
        %s683 = ssub.s32 %s17, 2
        // Predicated region
        $region57: #{tpu_custom_call.1} parent=55 // pred_check
          %p684 = pneg %p177
        $region58: #{tpu_custom_call.1} parent=55 // pred_check_branch
          %686 = sbr.rel (%p684) target = $region60
        $region59: #{tpu_custom_call.1} parent=55 // pred_region
          %s687 = sand.u32 %s162, 1
          %s688 = scalar_lea.sflag [#allocation3], %s687
          %s689 = sand.u32 %s162, 1
          %s690 = smul.addr %s689, 16
          %s691 = scalar_lea.vmem [#allocation2], %s690
          %692 = dma.done %s688, 256
        $region60: #{tpu_custom_call.1} parent=55 // pred_fallthru
          _
        // Predicated region
        $region61: #{tpu_custom_call.1} parent=55 // pred_check
          %p693 = pneg %p203
        $region62: #{tpu_custom_call.1} parent=55 // pred_check_branch
          %695 = sbr.rel (%p693) target = $region64
        $region63: #{tpu_custom_call.1} parent=55 // pred_region
          %s696 = smul.u32 2, %s23
          %p697 = scmp.lt.s32.totalorder %s696, 7
          %s698 = scalar_select %p697, %s696, 7
          %s699 = smul.addr %s698, 8
          %s700 = scalar_lea.vmem %s7, %s699
        $region64: #{tpu_custom_call.1} parent=55 // pred_fallthru
          _
      $region56: #{tpu_custom_call.1} parent=5 // pred_fallthru
        _
    $region6: #{tpu_custom_call.1} parent=1 // loop_footer
      %s21 = sadd.s32 1, %s17
    $region7: #{tpu_custom_call.1} parent=1 // loop_footer_branch
      %16 = sbr.rel target = $region3
    $region8: #{tpu_custom_call.1} parent=1 // loop_exit
      _
    %701 = vsyncpa [#allocation3], 1
    %s702 = scalar_lea.sflag [#allocation3], 1
    %703 = vsyncpa %s702, 1

</llo_original>
